<compile_context>
chip_gen: v7x
topology: tpu7x:2x2x1
jax: 0.10.0
libtpu: 0.0.40
codegen_flags: <defaults>
</compile_context>

<pallas_src>
import functools

import jax
import jax.numpy as jnp
import numpy as np
from jax.experimental import pallas as pl
from jax.experimental.pallas import tpu as pltpu

_LANE = 128
_BG_ALIGN = 32   # sublane-block alignment: covers f32 (8), bf16 (16), int8/fp8 (32)


def _device_config():
    """Per-chip tiling parameters (VMEM budget, block-size target, TC split)."""
    try:
        kind = jax.devices()[0].device_kind.lower()
    except Exception:
        kind = ""
    if "v7" in kind or "7x" in kind:
        # v7x: 64 MiB VMEM per TensorCore, 2 TensorCores per chip.
        return dict(splits=2, vmem_limit=40 * 2**20, target_block=8 * 2**20)
    if "v6" in kind or "v5e" in kind or ("v5" in kind and "lite" in kind):
        # v5e / v6e: 128 MiB VMEM, single TensorCore.
        return dict(splits=1, vmem_limit=64 * 2**20, target_block=14 * 2**20)
    # Unknown / older chips: stay conservative.
    return dict(splits=1, vmem_limit=32 * 2**20, target_block=6 * 2**20)


def _laplace_l1_kernel(x_ref, acc_ref):
    """One (k1, k2, bg, 128) block: valid 3x3 Laplace stencil, |.|, partial sums.

    acc_ref is the (1, bg, 128) f32 output block for this parallel split; it
    stays VMEM-resident across the reduction grid axis and is used directly as
    the accumulator.  Zero-padded N columns contribute exactly 0.
    """
    @pl.when(pl.program_id(1) == 0)
    def _():
        acc_ref[...] = jnp.zeros_like(acc_ref)

    k1, k2 = x_ref.shape[0], x_ref.shape[1]
    k1o, k2o = k1 - 2, k2 - 2

    for i1 in range(k1o):                     # small static loop over output rows
        # Three filter rows; all k2 slicing below is leading-dim re-addressing
        # on (.., bg, 128)-shaped values, so peak f32 temporaries stay bounded
        # per row rather than per tile.
        row_u = x_ref[i1]                     # (k2, bg, 128), native dtype
        row_c = x_ref[i1 + 1]
        row_d = x_ref[i1 + 2]
        c = row_c[1:1 + k2o].astype(jnp.float32)
        u = row_u[1:1 + k2o].astype(jnp.float32)
        d = row_d[1:1 + k2o].astype(jnp.float32)
        l = row_c[0:k2o].astype(jnp.float32)
        r = row_c[2:2 + k2o].astype(jnp.float32)
        # [[0,-1,0],[-1,4,-1],[0,-1,0]] expressed with adds/subs only.
        y = (c - u) + (c - d) + (c - l) + (c - r)
        acc_ref[...] += jnp.sum(jnp.abs(y), axis=0, keepdims=True)


def _plan(n, k1, k2, itemsize, block_lanes, splits):
    """Pick (splits, blocks_per_split, bg) in 128-lane groups of N."""
    cfg = _device_config()
    vmem_limit = cfg["vmem_limit"]
    k1o, k2o = k1 - 2, k2 - 2
    g_raw = pl.cdiv(n, _LANE)                 # 128-lane groups of N

    # Conservative VMEM bytes per sublane-group of the block:
    #   double-buffered input + per-row f32 rows/temporaries + f32 accumulator.
    per_bg = (2 * k1 * k2 * _LANE * itemsize
              + k1o * (3 * k2 + 2 * k2o) * _LANE * 4
              + 2 * _LANE * 4)
    budget = (vmem_limit * 3) // 4
    bg_max = max(_BG_ALIGN, (budget // per_bg) // _BG_ALIGN * _BG_ALIGN)

    if block_lanes is None and g_raw <= bg_max:
        # Fast path: whole (128-padded) tensor in a single grid step.
        return dict(splits=1, nb=1, bg=g_raw, g=g_raw, vmem_limit=vmem_limit)

    if block_lanes is not None:
        bg_cap = max(_BG_ALIGN, (block_lanes // _BG_ALIGN) * _BG_ALIGN)
    else:
        bg_t = cfg["target_block"] // (k1 * k2 * _LANE * itemsize)
        bg_cap = min(bg_max, max(_BG_ALIGN, (bg_t // _BG_ALIGN) * _BG_ALIGN))

    n_splits = cfg["splits"] if splits is None else splits
    if g_raw < n_splits * _BG_ALIGN:
        n_splits = 1                          # don't split tiny problems
    per_split = pl.cdiv(g_raw, n_splits)
    bg = min(bg_cap, pl.cdiv(per_split, _BG_ALIGN) * _BG_ALIGN)
    nb = pl.cdiv(per_split, bg)
    g = n_splits * nb * bg
    return dict(splits=n_splits, nb=nb, bg=bg, g=g, vmem_limit=vmem_limit)


@functools.partial(jax.jit, static_argnames=("block_lanes", "splits"))
def laplace_l1(x, *, block_lanes=None, splits=None):
    """x: (ic, oc, k1, k2) -> scalar f32 = mean |conv2d(x, laplace, padding=0)|.

    `block_lanes` / `splits` override the auto block size (in 128-lane groups
    of N = ic*oc) and the parallel split; mainly for testing the tiled path.
    """
    ic, oc, k1, k2 = x.shape
    if k1 < 3 or k2 < 3:
        raise ValueError(f"LaplaceL1 requires k1 >= 3 and k2 >= 3, got ({k1}, {k2}).")
    n = ic * oc
    k1o, k2o = k1 - 2, k2 - 2
    denom = n * k1o * k2o

    plan = _plan(n, k1, k2, jnp.dtype(x.dtype).itemsize, block_lanes, splits)
    n_splits, nb, bg, g = plan["splits"], plan["nb"], plan["bg"], plan["g"]
    n_pad = g * _LANE

    # One-shot relayout (fused under jit): (ic,oc,k1,k2) -> (k1,k2,N) -> pad N
    # -> (k1, k2, N/128, 128).  Zero columns contribute 0 to the |Laplace| sum.
    # If the caller already keeps this weight in (k1, k2, N) layout upstream,
    # this extra HBM round-trip disappears.
    x_t = jnp.transpose(x.reshape(n, k1, k2), (1, 2, 0))
    if n_pad > n:
        x_t = jnp.pad(x_t, ((0, 0), (0, 0), (0, n_pad - n)))
    x4 = x_t.reshape(k1, k2, g, _LANE)

    acc = pl.pallas_call(
        _laplace_l1_kernel,
        out_shape=jax.ShapeDtypeStruct((n_splits, bg, _LANE), jnp.float32),
        grid_spec=pltpu.PrefetchScalarGridSpec(
            num_scalar_prefetch=0,
            grid=(n_splits, nb),
            in_specs=[
                # Trailing (bg, 128) is dense N data: no tile padding, and the
                # k1/k2 stencil taps are free leading-dim slices.
                pl.BlockSpec((k1, k2, bg, _LANE),
                             lambda c, i: (0, 0, c * nb + i, 0)),
            ],
            # Same output block for every reduction step i -> VMEM-resident f32
            # accumulator; one disjoint lane-dense slab per parallel split.
            out_specs=pl.BlockSpec((1, bg, _LANE), lambda c, i: (c, 0, 0)),
        ),
        compiler_params=pltpu.CompilerParams(
            dimension_semantics=("parallel", "arbitrary"),
            vmem_limit_bytes=plan["vmem_limit"],
        ),
    )(x4)

    # Tiny final cross-lane reduction + mean in plain JAX (padded lanes are 0).
    return jnp.sum(acc) / jnp.float32(denom)


def _laplace_l1_ref(x):
    """Pure-JAX reference (matches the PyTorch module)."""
    ic, oc, k1, k2 = x.shape
    x3 = x.reshape(ic * oc, k1, k2).astype(jnp.float32)
    c = x3[:, 1:-1, 1:-1]
    y = (4.0 * c - x3[:, :-2, 1:-1] - x3[:, 2:, 1:-1]
         - x3[:, 1:-1, :-2] - x3[:, 1:-1, 2:])
    return jnp.mean(jnp.abs(y))


if __name__ == "__main__":
    key = jax.random.PRNGKey(0)
    ka, kb, kc, kd = jax.random.split(key, 4)

    # 1) 7x7 conv-weight, tiny N: single-block fast path.
    x1 = jax.random.normal(ka, (4, 8, 7, 7), dtype=jnp.float32)
    out1 = jax.block_until_ready(laplace_l1(x1))
    ref1 = jax.block_until_ready(_laplace_l1_ref(x1))
    np.testing.assert_allclose(np.asarray(out1), np.asarray(ref1), rtol=1e-5, atol=1e-5)

    # 2) 5x5 conv-weight, N=512: still a single-block fast path.
    x2 = jax.random.normal(kb, (8, 64, 5, 5), dtype=jnp.float32)
    out2 = jax.block_until_ready(laplace_l1(x2))
    ref2 = jax.block_until_ready(_laplace_l1_ref(x2))
    np.testing.assert_allclose(np.asarray(out2), np.asarray(ref2), rtol=1e-5, atol=1e-5)

    # 3) 3x3, N=16384: forced tiled path, 2-way split, multi-step reduction axis.
    x3 = jax.random.normal(kc, (64, 256, 3, 3), dtype=jnp.float32)
    out3 = jax.block_until_ready(laplace_l1(x3, block_lanes=32, splits=2))
    ref3 = jax.block_until_ready(_laplace_l1_ref(x3))
    np.testing.assert_allclose(np.asarray(out3), np.asarray(ref3), rtol=1e-4, atol=1e-4)

    # 4) bf16 input, tiled path with N zero-padding (N not a multiple of the block span).
    x4 = jax.random.normal(kd, (24, 96, 3, 3), dtype=jnp.bfloat16)
    out4 = jax.block_until_ready(laplace_l1(x4, block_lanes=32, splits=1))
    ref4 = jax.block_until_ready(_laplace_l1_ref(x4))
    np.testing.assert_allclose(np.asarray(out4), np.asarray(ref4), rtol=1e-4, atol=1e-4)

    print("KERNEL_OK")
</pallas_src>

<mosaic_0001>
module attributes {stable_mosaic.version = 11 : i64} {
  func.func @_laplace_l1_kernel(%arg0: i32, %arg1: i32, %arg2: memref<7x7x1x128xf32, #tpu.memory_space<vmem>>, %arg3: memref<1x1x128xf32, #tpu.memory_space<vmem>>) attributes {dimension_semantics = [#tpu.dimension_semantics<parallel>, #tpu.dimension_semantics<arbitrary>], iteration_bounds = array<i64: 1, 1>, scalar_prefetch = 0 : i64, scratch_operands = 0 : i64, tpu.core_type = #tpu.core_type<tc>, window_params = [{transform_indices = @transform_0, window_bounds = array<i64: 7, 7, 1, 128>}, {transform_indices = @transform_1, window_bounds = array<i64: 1, 1, 128>}]} {
    %c0_i32 = arith.constant 0 : i32
    %0 = arith.cmpi eq, %arg1, %c0_i32 : i32
    %1 = arith.extui %0 : i1 to i32
    %c0_i32_0 = arith.constant 0 : i32
    %2 = arith.cmpi ne, %1, %c0_i32_0 : i32
    scf.if %2 {
      %cst_88 = arith.constant 0.000000e+00 : f32
      %123 = vector.broadcast %cst_88 : f32 to vector<1x1x128xf32>
      %c0_89 = arith.constant 0 : index
      %c0_90 = arith.constant 0 : index
      %c0_91 = arith.constant 0 : index
      %124 = vector.load %arg3[%c0_89, %c0_90, %c0_91] : memref<1x1x128xf32, #tpu.memory_space<vmem>>, vector<1x1x128xf32>
      tpu.vector_store %arg3[%c0_89, %c0_90, %c0_91], %123 {strides = array<i32>} : memref<1x1x128xf32, #tpu.memory_space<vmem>>, vector<1x1x128xf32>,
    } else {
    }
    %c0 = arith.constant 0 : index
    %c0_1 = arith.constant 0 : index
    %c0_2 = arith.constant 0 : index
    %c0_3 = arith.constant 0 : index
    %3 = vector.load %arg2[%c0, %c0_1, %c0_2, %c0_3] : memref<7x7x1x128xf32, #tpu.memory_space<vmem>>, vector<1x7x1x128xf32>
    %4 = vector.shape_cast %3 : vector<1x7x1x128xf32> to vector<7x1x128xf32>
    %c1 = arith.constant 1 : index
    %c0_4 = arith.constant 0 : index
    %c0_5 = arith.constant 0 : index
    %c0_6 = arith.constant 0 : index
    %5 = vector.load %arg2[%c1, %c0_4, %c0_5, %c0_6] : memref<7x7x1x128xf32, #tpu.memory_space<vmem>>, vector<1x7x1x128xf32>
    %6 = vector.shape_cast %5 : vector<1x7x1x128xf32> to vector<7x1x128xf32>
    %c2 = arith.constant 2 : index
    %c0_7 = arith.constant 0 : index
    %c0_8 = arith.constant 0 : index
    %c0_9 = arith.constant 0 : index
    %7 = vector.load %arg2[%c2, %c0_7, %c0_8, %c0_9] : memref<7x7x1x128xf32, #tpu.memory_space<vmem>>, vector<1x7x1x128xf32>
    %8 = vector.shape_cast %7 : vector<1x7x1x128xf32> to vector<7x1x128xf32>
    %9 = vector.extract_strided_slice %6 {offsets = [1, 0, 0], sizes = [5, 1, 128], strides = [1, 1, 1]} : vector<7x1x128xf32> to vector<5x1x128xf32>
    %10 = vector.extract_strided_slice %4 {offsets = [1, 0, 0], sizes = [5, 1, 128], strides = [1, 1, 1]} : vector<7x1x128xf32> to vector<5x1x128xf32>
    %11 = vector.extract_strided_slice %8 {offsets = [1, 0, 0], sizes = [5, 1, 128], strides = [1, 1, 1]} : vector<7x1x128xf32> to vector<5x1x128xf32>
    %12 = vector.extract_strided_slice %6 {offsets = [0, 0, 0], sizes = [5, 1, 128], strides = [1, 1, 1]} : vector<7x1x128xf32> to vector<5x1x128xf32>
    %13 = vector.extract_strided_slice %6 {offsets = [2, 0, 0], sizes = [5, 1, 128], strides = [1, 1, 1]} : vector<7x1x128xf32> to vector<5x1x128xf32>
    %14 = arith.subf %9, %10 : vector<5x1x128xf32>
    %15 = arith.subf %9, %11 : vector<5x1x128xf32>
    %16 = arith.addf %14, %15 : vector<5x1x128xf32>
    %17 = arith.subf %9, %12 : vector<5x1x128xf32>
    %18 = arith.addf %16, %17 : vector<5x1x128xf32>
    %19 = arith.subf %9, %13 : vector<5x1x128xf32>
    %20 = arith.addf %18, %19 : vector<5x1x128xf32>
    %c0_10 = arith.constant 0 : index
    %c0_11 = arith.constant 0 : index
    %c0_12 = arith.constant 0 : index
    %21 = vector.load %arg3[%c0_10, %c0_11, %c0_12] : memref<1x1x128xf32, #tpu.memory_space<vmem>>, vector<1x1x128xf32>
    %22 = math.absf %20 : vector<5x1x128xf32>
    %cst = arith.constant dense<0.000000e+00> : vector<1x128xf32>
    %23 = vector.multi_reduction <add>, %22, %cst [0] : vector<5x1x128xf32> to vector<1x128xf32>
    %24 = vector.shape_cast %23 : vector<1x128xf32> to vector<1x1x128xf32>
    %25 = arith.addf %21, %24 : vector<1x1x128xf32>
    %c0_13 = arith.constant 0 : index
    %c0_14 = arith.constant 0 : index
    %c0_15 = arith.constant 0 : index
    %26 = vector.load %arg3[%c0_13, %c0_14, %c0_15] : memref<1x1x128xf32, #tpu.memory_space<vmem>>, vector<1x1x128xf32>
    tpu.vector_store %arg3[%c0_13, %c0_14, %c0_15], %25 {strides = array<i32>} : memref<1x1x128xf32, #tpu.memory_space<vmem>>, vector<1x1x128xf32>,
    %c1_16 = arith.constant 1 : index
    %c0_17 = arith.constant 0 : index
    %c0_18 = arith.constant 0 : index
    %c0_19 = arith.constant 0 : index
    %27 = vector.load %arg2[%c1_16, %c0_17, %c0_18, %c0_19] : memref<7x7x1x128xf32, #tpu.memory_space<vmem>>, vector<1x7x1x128xf32>
    %28 = vector.shape_cast %27 : vector<1x7x1x128xf32> to vector<7x1x128xf32>
    %c2_20 = arith.constant 2 : index
    %c0_21 = arith.constant 0 : index
    %c0_22 = arith.constant 0 : index
    %c0_23 = arith.constant 0 : index
    %29 = vector.load %arg2[%c2_20, %c0_21, %c0_22, %c0_23] : memref<7x7x1x128xf32, #tpu.memory_space<vmem>>, vector<1x7x1x128xf32>
    %30 = vector.shape_cast %29 : vector<1x7x1x128xf32> to vector<7x1x128xf32>
    %c3 = arith.constant 3 : index
    %c0_24 = arith.constant 0 : index
    %c0_25 = arith.constant 0 : index
    %c0_26 = arith.constant 0 : index
    %31 = vector.load %arg2[%c3, %c0_24, %c0_25, %c0_26] : memref<7x7x1x128xf32, #tpu.memory_space<vmem>>, vector<1x7x1x128xf32>
    %32 = vector.shape_cast %31 : vector<1x7x1x128xf32> to vector<7x1x128xf32>
    %33 = vector.extract_strided_slice %30 {offsets = [1, 0, 0], sizes = [5, 1, 128], strides = [1, 1, 1]} : vector<7x1x128xf32> to vector<5x1x128xf32>
    %34 = vector.extract_strided_slice %28 {offsets = [1, 0, 0], sizes = [5, 1, 128], strides = [1, 1, 1]} : vector<7x1x128xf32> to vector<5x1x128xf32>
    %35 = vector.extract_strided_slice %32 {offsets = [1, 0, 0], sizes = [5, 1, 128], strides = [1, 1, 1]} : vector<7x1x128xf32> to vector<5x1x128xf32>
    %36 = vector.extract_strided_slice %30 {offsets = [0, 0, 0], sizes = [5, 1, 128], strides = [1, 1, 1]} : vector<7x1x128xf32> to vector<5x1x128xf32>
    %37 = vector.extract_strided_slice %30 {offsets = [2, 0, 0], sizes = [5, 1, 128], strides = [1, 1, 1]} : vector<7x1x128xf32> to vector<5x1x128xf32>
    %38 = arith.subf %33, %34 : vector<5x1x128xf32>
    %39 = arith.subf %33, %35 : vector<5x1x128xf32>
    %40 = arith.addf %38, %39 : vector<5x1x128xf32>
    %41 = arith.subf %33, %36 : vector<5x1x128xf32>
    %42 = arith.addf %40, %41 : vector<5x1x128xf32>
    %43 = arith.subf %33, %37 : vector<5x1x128xf32>
    %44 = arith.addf %42, %43 : vector<5x1x128xf32>
    %c0_27 = arith.constant 0 : index
    %c0_28 = arith.constant 0 : index
    %c0_29 = arith.constant 0 : index
    %45 = vector.load %arg3[%c0_27, %c0_28, %c0_29] : memref<1x1x128xf32, #tpu.memory_space<vmem>>, vector<1x1x128xf32>
    %46 = math.absf %44 : vector<5x1x128xf32>
    %cst_30 = arith.constant dense<0.000000e+00> : vector<1x128xf32>
    %47 = vector.multi_reduction <add>, %46, %cst_30 [0] : vector<5x1x128xf32> to vector<1x128xf32>
    %48 = vector.shape_cast %47 : vector<1x128xf32> to vector<1x1x128xf32>
    %49 = arith.addf %45, %48 : vector<1x1x128xf32>
    %c0_31 = arith.constant 0 : index
    %c0_32 = arith.constant 0 : index
    %c0_33 = arith.constant 0 : index
    %50 = vector.load %arg3[%c0_31, %c0_32, %c0_33] : memref<1x1x128xf32, #tpu.memory_space<vmem>>, vector<1x1x128xf32>
    tpu.vector_store %arg3[%c0_31, %c0_32, %c0_33], %49 {strides = array<i32>} : memref<1x1x128xf32, #tpu.memory_space<vmem>>, vector<1x1x128xf32>,
    %c2_34 = arith.constant 2 : index
    %c0_35 = arith.constant 0 : index
    %c0_36 = arith.constant 0 : index
    %c0_37 = arith.constant 0 : index
    %51 = vector.load %arg2[%c2_34, %c0_35, %c0_36, %c0_37] : memref<7x7x1x128xf32, #tpu.memory_space<vmem>>, vector<1x7x1x128xf32>
    %52 = vector.shape_cast %51 : vector<1x7x1x128xf32> to vector<7x1x128xf32>
    %c3_38 = arith.constant 3 : index
    %c0_39 = arith.constant 0 : index
    %c0_40 = arith.constant 0 : index
    %c0_41 = arith.constant 0 : index
    %53 = vector.load %arg2[%c3_38, %c0_39, %c0_40, %c0_41] : memref<7x7x1x128xf32, #tpu.memory_space<vmem>>, vector<1x7x1x128xf32>
    %54 = vector.shape_cast %53 : vector<1x7x1x128xf32> to vector<7x1x128xf32>
    %c4 = arith.constant 4 : index
    %c0_42 = arith.constant 0 : index
    %c0_43 = arith.constant 0 : index
    %c0_44 = arith.constant 0 : index
    %55 = vector.load %arg2[%c4, %c0_42, %c0_43, %c0_44] : memref<7x7x1x128xf32, #tpu.memory_space<vmem>>, vector<1x7x1x128xf32>
    %56 = vector.shape_cast %55 : vector<1x7x1x128xf32> to vector<7x1x128xf32>
    %57 = vector.extract_strided_slice %54 {offsets = [1, 0, 0], sizes = [5, 1, 128], strides = [1, 1, 1]} : vector<7x1x128xf32> to vector<5x1x128xf32>
    %58 = vector.extract_strided_slice %52 {offsets = [1, 0, 0], sizes = [5, 1, 128], strides = [1, 1, 1]} : vector<7x1x128xf32> to vector<5x1x128xf32>
    %59 = vector.extract_strided_slice %56 {offsets = [1, 0, 0], sizes = [5, 1, 128], strides = [1, 1, 1]} : vector<7x1x128xf32> to vector<5x1x128xf32>
    %60 = vector.extract_strided_slice %54 {offsets = [0, 0, 0], sizes = [5, 1, 128], strides = [1, 1, 1]} : vector<7x1x128xf32> to vector<5x1x128xf32>
    %61 = vector.extract_strided_slice %54 {offsets = [2, 0, 0], sizes = [5, 1, 128], strides = [1, 1, 1]} : vector<7x1x128xf32> to vector<5x1x128xf32>
    %62 = arith.subf %57, %58 : vector<5x1x128xf32>
    %63 = arith.subf %57, %59 : vector<5x1x128xf32>
    %64 = arith.addf %62, %63 : vector<5x1x128xf32>
    %65 = arith.subf %57, %60 : vector<5x1x128xf32>
    %66 = arith.addf %64, %65 : vector<5x1x128xf32>
    %67 = arith.subf %57, %61 : vector<5x1x128xf32>
    %68 = arith.addf %66, %67 : vector<5x1x128xf32>
    %c0_45 = arith.constant 0 : index
    %c0_46 = arith.constant 0 : index
    %c0_47 = arith.constant 0 : index
    %69 = vector.load %arg3[%c0_45, %c0_46, %c0_47] : memref<1x1x128xf32, #tpu.memory_space<vmem>>, vector<1x1x128xf32>
    %70 = math.absf %68 : vector<5x1x128xf32>
    %cst_48 = arith.constant dense<0.000000e+00> : vector<1x128xf32>
    %71 = vector.multi_reduction <add>, %70, %cst_48 [0] : vector<5x1x128xf32> to vector<1x128xf32>
    %72 = vector.shape_cast %71 : vector<1x128xf32> to vector<1x1x128xf32>
    %73 = arith.addf %69, %72 : vector<1x1x128xf32>
    %c0_49 = arith.constant 0 : index
    %c0_50 = arith.constant 0 : index
    %c0_51 = arith.constant 0 : index
    %74 = vector.load %arg3[%c0_49, %c0_50, %c0_51] : memref<1x1x128xf32, #tpu.memory_space<vmem>>, vector<1x1x128xf32>
    tpu.vector_store %arg3[%c0_49, %c0_50, %c0_51], %73 {strides = array<i32>} : memref<1x1x128xf32, #tpu.memory_space<vmem>>, vector<1x1x128xf32>,
    %c3_52 = arith.constant 3 : index
    %c0_53 = arith.constant 0 : index
    %c0_54 = arith.constant 0 : index
    %c0_55 = arith.constant 0 : index
    %75 = vector.load %arg2[%c3_52, %c0_53, %c0_54, %c0_55] : memref<7x7x1x128xf32, #tpu.memory_space<vmem>>, vector<1x7x1x128xf32>
    %76 = vector.shape_cast %75 : vector<1x7x1x128xf32> to vector<7x1x128xf32>
    %c4_56 = arith.constant 4 : index
    %c0_57 = arith.constant 0 : index
    %c0_58 = arith.constant 0 : index
    %c0_59 = arith.constant 0 : index
    %77 = vector.load %arg2[%c4_56, %c0_57, %c0_58, %c0_59] : memref<7x7x1x128xf32, #tpu.memory_space<vmem>>, vector<1x7x1x128xf32>
    %78 = vector.shape_cast %77 : vector<1x7x1x128xf32> to vector<7x1x128xf32>
    %c5 = arith.constant 5 : index
    %c0_60 = arith.constant 0 : index
    %c0_61 = arith.constant 0 : index
    %c0_62 = arith.constant 0 : index
    %79 = vector.load %arg2[%c5, %c0_60, %c0_61, %c0_62] : memref<7x7x1x128xf32, #tpu.memory_space<vmem>>, vector<1x7x1x128xf32>
    %80 = vector.shape_cast %79 : vector<1x7x1x128xf32> to vector<7x1x128xf32>
    %81 = vector.extract_strided_slice %78 {offsets = [1, 0, 0], sizes = [5, 1, 128], strides = [1, 1, 1]} : vector<7x1x128xf32> to vector<5x1x128xf32>
    %82 = vector.extract_strided_slice %76 {offsets = [1, 0, 0], sizes = [5, 1, 128], strides = [1, 1, 1]} : vector<7x1x128xf32> to vector<5x1x128xf32>
    %83 = vector.extract_strided_slice %80 {offsets = [1, 0, 0], sizes = [5, 1, 128], strides = [1, 1, 1]} : vector<7x1x128xf32> to vector<5x1x128xf32>
    %84 = vector.extract_strided_slice %78 {offsets = [0, 0, 0], sizes = [5, 1, 128], strides = [1, 1, 1]} : vector<7x1x128xf32> to vector<5x1x128xf32>
    %85 = vector.extract_strided_slice %78 {offsets = [2, 0, 0], sizes = [5, 1, 128], strides = [1, 1, 1]} : vector<7x1x128xf32> to vector<5x1x128xf32>
    %86 = arith.subf %81, %82 : vector<5x1x128xf32>
    %87 = arith.subf %81, %83 : vector<5x1x128xf32>
    %88 = arith.addf %86, %87 : vector<5x1x128xf32>
    %89 = arith.subf %81, %84 : vector<5x1x128xf32>
    %90 = arith.addf %88, %89 : vector<5x1x128xf32>
    %91 = arith.subf %81, %85 : vector<5x1x128xf32>
    %92 = arith.addf %90, %91 : vector<5x1x128xf32>
    %c0_63 = arith.constant 0 : index
    %c0_64 = arith.constant 0 : index
    %c0_65 = arith.constant 0 : index
    %93 = vector.load %arg3[%c0_63, %c0_64, %c0_65] : memref<1x1x128xf32, #tpu.memory_space<vmem>>, vector<1x1x128xf32>
    %94 = math.absf %92 : vector<5x1x128xf32>
    %cst_66 = arith.constant dense<0.000000e+00> : vector<1x128xf32>
    %95 = vector.multi_reduction <add>, %94, %cst_66 [0] : vector<5x1x128xf32> to vector<1x128xf32>
    %96 = vector.shape_cast %95 : vector<1x128xf32> to vector<1x1x128xf32>
    %97 = arith.addf %93, %96 : vector<1x1x128xf32>
    %c0_67 = arith.constant 0 : index
    %c0_68 = arith.constant 0 : index
    %c0_69 = arith.constant 0 : index
    %98 = vector.load %arg3[%c0_67, %c0_68, %c0_69] : memref<1x1x128xf32, #tpu.memory_space<vmem>>, vector<1x1x128xf32>
    tpu.vector_store %arg3[%c0_67, %c0_68, %c0_69], %97 {strides = array<i32>} : memref<1x1x128xf32, #tpu.memory_space<vmem>>, vector<1x1x128xf32>,
    %c4_70 = arith.constant 4 : index
    %c0_71 = arith.constant 0 : index
    %c0_72 = arith.constant 0 : index
    %c0_73 = arith.constant 0 : index
    %99 = vector.load %arg2[%c4_70, %c0_71, %c0_72, %c0_73] : memref<7x7x1x128xf32, #tpu.memory_space<vmem>>, vector<1x7x1x128xf32>
    %100 = vector.shape_cast %99 : vector<1x7x1x128xf32> to vector<7x1x128xf32>
    %c5_74 = arith.constant 5 : index
    %c0_75 = arith.constant 0 : index
    %c0_76 = arith.constant 0 : index
    %c0_77 = arith.constant 0 : index
    %101 = vector.load %arg2[%c5_74, %c0_75, %c0_76, %c0_77] : memref<7x7x1x128xf32, #tpu.memory_space<vmem>>, vector<1x7x1x128xf32>
    %102 = vector.shape_cast %101 : vector<1x7x1x128xf32> to vector<7x1x128xf32>
    %c6 = arith.constant 6 : index
    %c0_78 = arith.constant 0 : index
    %c0_79 = arith.constant 0 : index
    %c0_80 = arith.constant 0 : index
    %103 = vector.load %arg2[%c6, %c0_78, %c0_79, %c0_80] : memref<7x7x1x128xf32, #tpu.memory_space<vmem>>, vector<1x7x1x128xf32>
    %104 = vector.shape_cast %103 : vector<1x7x1x128xf32> to vector<7x1x128xf32>
    %105 = vector.extract_strided_slice %102 {offsets = [1, 0, 0], sizes = [5, 1, 128], strides = [1, 1, 1]} : vector<7x1x128xf32> to vector<5x1x128xf32>
    %106 = vector.extract_strided_slice %100 {offsets = [1, 0, 0], sizes = [5, 1, 128], strides = [1, 1, 1]} : vector<7x1x128xf32> to vector<5x1x128xf32>
    %107 = vector.extract_strided_slice %104 {offsets = [1, 0, 0], sizes = [5, 1, 128], strides = [1, 1, 1]} : vector<7x1x128xf32> to vector<5x1x128xf32>
    %108 = vector.extract_strided_slice %102 {offsets = [0, 0, 0], sizes = [5, 1, 128], strides = [1, 1, 1]} : vector<7x1x128xf32> to vector<5x1x128xf32>
    %109 = vector.extract_strided_slice %102 {offsets = [2, 0, 0], sizes = [5, 1, 128], strides = [1, 1, 1]} : vector<7x1x128xf32> to vector<5x1x128xf32>
    %110 = arith.subf %105, %106 : vector<5x1x128xf32>
    %111 = arith.subf %105, %107 : vector<5x1x128xf32>
    %112 = arith.addf %110, %111 : vector<5x1x128xf32>
    %113 = arith.subf %105, %108 : vector<5x1x128xf32>
    %114 = arith.addf %112, %113 : vector<5x1x128xf32>
    %115 = arith.subf %105, %109 : vector<5x1x128xf32>
    %116 = arith.addf %114, %115 : vector<5x1x128xf32>
    %c0_81 = arith.constant 0 : index
    %c0_82 = arith.constant 0 : index
    %c0_83 = arith.constant 0 : index
    %117 = vector.load %arg3[%c0_81, %c0_82, %c0_83] : memref<1x1x128xf32, #tpu.memory_space<vmem>>, vector<1x1x128xf32>
    %118 = math.absf %116 : vector<5x1x128xf32>
    %cst_84 = arith.constant dense<0.000000e+00> : vector<1x128xf32>
    %119 = vector.multi_reduction <add>, %118, %cst_84 [0] : vector<5x1x128xf32> to vector<1x128xf32>
    %120 = vector.shape_cast %119 : vector<1x128xf32> to vector<1x1x128xf32>
    %121 = arith.addf %117, %120 : vector<1x1x128xf32>
    %c0_85 = arith.constant 0 : index
    %c0_86 = arith.constant 0 : index
    %c0_87 = arith.constant 0 : index
    %122 = vector.load %arg3[%c0_85, %c0_86, %c0_87] : memref<1x1x128xf32, #tpu.memory_space<vmem>>, vector<1x1x128xf32>
    tpu.vector_store %arg3[%c0_85, %c0_86, %c0_87], %121 {strides = array<i32>} : memref<1x1x128xf32, #tpu.memory_space<vmem>>, vector<1x1x128xf32>,
    return
  }
  func.func @transform_0(%arg0: i32, %arg1: i32) -> (i32, i32, i32, i32) {
    %c1_i32 = arith.constant 1 : i32
    %0 = arith.muli %arg0, %c1_i32 : i32
    %1 = arith.addi %0, %arg1 : i32
    %c0_i32 = arith.constant 0 : i32
    %c0_i32_0 = arith.constant 0 : i32
    %c0_i32_1 = arith.constant 0 : i32
    %c0_i32_2 = arith.constant 0 : i32
    return %c0_i32, %c0_i32_0, %1, %c0_i32_1 : i32, i32, i32, i32
  }
  func.func @transform_1(%arg0: i32, %arg1: i32) -> (i32, i32, i32) {
    %c0_i32 = arith.constant 0 : i32
    %c0_i32_0 = arith.constant 0 : i32
    %c0_i32_1 = arith.constant 0 : i32
    return %arg0, %c0_i32, %c0_i32_0 : i32, i32, i32
  }
}

</mosaic_0001>

<llo_original>
// kernel: laplace_l1.1
$region0: #{laplace_l1.1}
  #allocation0 [shape = 'u32[]', space=smem, size = 0x4, offset = 0x4, fixed_abs, tag = 'smem constant byte address 0x4 - core index']
  #allocation1 [shape = 'u32[144,128]{1,0:T(1,128)}', space=vmem, size = 0x12000, scoped, tag = 'internal scratch']
  %s0 = inlined_call_operand.vmem [shape: f32[7,7,1,128], index: 0, kind: input, shape index: {}]
  %s1 = inlined_call_operand.vmem [shape: f32[1,1,128], index: 1, kind: output, shape index: {}]
  %s2 = sld [smem:[#allocation0]]
  $region18: #{laplace_l1.1} parent=0
    _
  %s4 = ssub.s32 1, %s2
  %s5 = scalar_select 0, %s4, %s2
  // Predicated region
  $region2: #{laplace_l1.1} parent=0 // pred_check
    _
  $region3: #{laplace_l1.1} parent=0 // pred_check_branch
    %7 = sbr.rel (0) target = $region5
  $region4: #{laplace_l1.1} parent=0 // pred_region
    %s8 = sadd.s32 0, 0
    %p9 = scmp.lt.s32.totalorder %s8, 0
    %s10 = scalar_select %p9, %s8, 0
    %s11 = scalar_lea.vmem %s0, %s10
    %s12 = sadd.s32 0, 0
  $region5: #{laplace_l1.1} parent=0 // pred_fallthru
    _
  %s13 = sadd.s32 0, 0
  %p14 = scmp.lt.s32.totalorder %s13, 0
  %s15 = scalar_select %p14, %s13, 0
  %s16 = scalar_lea.vmem %s0, %s15
  %s17 = sadd.s32 0, 0
  %p18 = scmp.lt.s32.totalorder %s17, 0
  %s19 = scalar_select %p18, %s17, 0
  %s20 = scalar_lea.vmem %s0, %s19
  %s21 = sadd.s32 0, 0
  %p22 = scmp.eq.s32.totalorder 0, 0
  // Predicated region
  $region6: #{laplace_l1.1} parent=0 // pred_check
    %p23 = pneg %p22
  $region7: #{laplace_l1.1} parent=0 // pred_check_branch
    %25 = sbr.rel (%p23) target = $region9
  $region8: #{laplace_l1.1} parent=0 // pred_region
    %26 = vst [vmem:[%s1] sm:$0x1] 0.0
  $region9: #{laplace_l1.1} parent=0 // pred_fallthru
    _
  %v27 = vld [vmem:[%s20 + $0x1] sm:$0x1]
  %v28 = vld [vmem:[%s20 + $0x2] sm:$0x1]
  %v29 = vld [vmem:[%s20 + $0x3] sm:$0x1]
  %v30 = vld [vmem:[%s20 + $0x4] sm:$0x1]
  %v31 = vld [vmem:[%s20 + $0x5] sm:$0x1]
  %s32 = scalar_lea.vmem %s20, 7
  %v33 = vld [vmem:[%s32] sm:$0x1]
  %v34 = vld [vmem:[%s32 + $0x1] sm:$0x1]
  %v35 = vld [vmem:[%s32 + $0x2] sm:$0x1]
  %v36 = vld [vmem:[%s32 + $0x3] sm:$0x1]
  %v37 = vld [vmem:[%s32 + $0x4] sm:$0x1]
  %v38 = vld [vmem:[%s32 + $0x5] sm:$0x1]
  %v39 = vld [vmem:[%s32 + $0x6] sm:$0x1]
  %s40 = scalar_lea.vmem %s20, 14
  %v41 = vld [vmem:[%s40 + $0x1] sm:$0x1]
  %v42 = vld [vmem:[%s40 + $0x2] sm:$0x1]
  %v43 = vld [vmem:[%s40 + $0x3] sm:$0x1]
  %v44 = vld [vmem:[%s40 + $0x4] sm:$0x1]
  %v45 = vld [vmem:[%s40 + $0x5] sm:$0x1]
  %v46 = vsub.f32 %v34, %v27
  %v47 = vsub.f32 %v35, %v28
  %v48 = vsub.f32 %v36, %v29
  %v49 = vsub.f32 %v37, %v30
  %v50 = vsub.f32 %v38, %v31
  %v51 = vsub.f32 %v34, %v41
  %v52 = vsub.f32 %v35, %v42
  %v53 = vsub.f32 %v36, %v43
  %v54 = vsub.f32 %v37, %v44
  %v55 = vsub.f32 %v38, %v45
  %v56 = vadd.f32 %v46, %v51
  %v57 = vadd.f32 %v47, %v52
  %v58 = vadd.f32 %v48, %v53
  %v59 = vadd.f32 %v49, %v54
  %v60 = vadd.f32 %v50, %v55
  %v61 = vsub.f32 %v34, %v33
  %v62 = vsub.f32 %v35, %v34
  %v63 = vsub.f32 %v36, %v35
  %v64 = vsub.f32 %v37, %v36
  %v65 = vsub.f32 %v38, %v37
  %v66 = vadd.f32 %v56, %v61
  %v67 = vadd.f32 %v57, %v62
  %v68 = vadd.f32 %v58, %v63
  %v69 = vadd.f32 %v59, %v64
  %v70 = vadd.f32 %v60, %v65
  %v71 = vsub.f32 %v34, %v35
  %v72 = vsub.f32 %v35, %v36
  %v73 = vsub.f32 %v36, %v37
  %v74 = vsub.f32 %v37, %v38
  %v75 = vsub.f32 %v38, %v39
  %v76 = vadd.f32 %v66, %v71
  %v77 = vadd.f32 %v67, %v72
  %v78 = vadd.f32 %v68, %v73
  %v79 = vadd.f32 %v69, %v74
  %v80 = vadd.f32 %v70, %v75
  %v81 = vld [vmem:[%s1] sm:$0x1]
  %v82 = vand.u32 2147483647, %v76
  %v83 = vand.u32 2147483647, %v77
  %v84 = vand.u32 2147483647, %v78
  %v85 = vand.u32 2147483647, %v79
  %v86 = vand.u32 2147483647, %v80
  %vm87 = vcmask 1040384
  %v88 = vsel %vm87, %v82, 0.0
  %v89 = vsel %vm87, %v83, 0.0
  %v90 = vadd.f32 %v88, %v89
  %v91 = vsel %vm87, %v84, 0.0
  %v92 = vadd.f32 %v90, %v91
  %v93 = vsel %vm87, %v85, 0.0
  %v94 = vadd.f32 %v92, %v93
  %v95 = vsel %vm87, %v86, 0.0
  %v96 = vadd.f32 %v94, %v95
  %v97 = vadd.f32 %v81, %v96
  %98 = vst [vmem:[%s1] sm:$0x1] %v97
  %v99 = vld [vmem:[%s32 + $0x1] sm:$0x1]
  %v100 = vld [vmem:[%s32 + $0x2] sm:$0x1]
  %v101 = vld [vmem:[%s32 + $0x3] sm:$0x1]
  %v102 = vld [vmem:[%s32 + $0x4] sm:$0x1]
  %v103 = vld [vmem:[%s32 + $0x5] sm:$0x1]
  %v104 = vld [vmem:[%s40] sm:$0x1]
  %v105 = vld [vmem:[%s40 + $0x1] sm:$0x1]
  %v106 = vld [vmem:[%s40 + $0x2] sm:$0x1]
  %v107 = vld [vmem:[%s40 + $0x3] sm:$0x1]
  %v108 = vld [vmem:[%s40 + $0x4] sm:$0x1]
  %v109 = vld [vmem:[%s40 + $0x5] sm:$0x1]
  %v110 = vld [vmem:[%s40 + $0x6] sm:$0x1]
  %s111 = scalar_lea.vmem %s20, 21
  %v112 = vld [vmem:[%s111 + $0x1] sm:$0x1]
  %v113 = vld [vmem:[%s111 + $0x2] sm:$0x1]
  %v114 = vld [vmem:[%s111 + $0x3] sm:$0x1]
  %v115 = vld [vmem:[%s111 + $0x4] sm:$0x1]
  %v116 = vld [vmem:[%s111 + $0x5] sm:$0x1]
  %v117 = vsub.f32 %v105, %v99
  %v118 = vsub.f32 %v106, %v100
  %v119 = vsub.f32 %v107, %v101
  %v120 = vsub.f32 %v108, %v102
  %v121 = vsub.f32 %v109, %v103
  %v122 = vsub.f32 %v105, %v112
  %v123 = vsub.f32 %v106, %v113
  %v124 = vsub.f32 %v107, %v114
  %v125 = vsub.f32 %v108, %v115
  %v126 = vsub.f32 %v109, %v116
  %v127 = vadd.f32 %v117, %v122
  %v128 = vadd.f32 %v118, %v123
  %v129 = vadd.f32 %v119, %v124
  %v130 = vadd.f32 %v120, %v125
  %v131 = vadd.f32 %v121, %v126
  %v132 = vsub.f32 %v105, %v104
  %v133 = vsub.f32 %v106, %v105
  %v134 = vsub.f32 %v107, %v106
  %v135 = vsub.f32 %v108, %v107
  %v136 = vsub.f32 %v109, %v108
  %v137 = vadd.f32 %v127, %v132
  %v138 = vadd.f32 %v128, %v133
  %v139 = vadd.f32 %v129, %v134
  %v140 = vadd.f32 %v130, %v135
  %v141 = vadd.f32 %v131, %v136
  %v142 = vsub.f32 %v105, %v106
  %v143 = vsub.f32 %v106, %v107
  %v144 = vsub.f32 %v107, %v108
  %v145 = vsub.f32 %v108, %v109
  %v146 = vsub.f32 %v109, %v110
  %v147 = vadd.f32 %v137, %v142
  %v148 = vadd.f32 %v138, %v143
  %v149 = vadd.f32 %v139, %v144
  %v150 = vadd.f32 %v140, %v145
  %v151 = vadd.f32 %v141, %v146
  %v152 = vld [vmem:[%s1] sm:$0x1]
  %v153 = vand.u32 2147483647, %v147
  %v154 = vand.u32 2147483647, %v148
  %v155 = vand.u32 2147483647, %v149
  %v156 = vand.u32 2147483647, %v150
  %v157 = vand.u32 2147483647, %v151
  %v158 = vsel %vm87, %v153, 0.0
  %v159 = vsel %vm87, %v154, 0.0
  %v160 = vadd.f32 %v158, %v159
  %v161 = vsel %vm87, %v155, 0.0
  %v162 = vadd.f32 %v160, %v161
  %v163 = vsel %vm87, %v156, 0.0
  %v164 = vadd.f32 %v162, %v163
  %v165 = vsel %vm87, %v157, 0.0
  %v166 = vadd.f32 %v164, %v165
  %v167 = vadd.f32 %v152, %v166
  %168 = vst [vmem:[%s1] sm:$0x1] %v167
  %v169 = vld [vmem:[%s40 + $0x1] sm:$0x1]
  %v170 = vld [vmem:[%s40 + $0x2] sm:$0x1]
  %v171 = vld [vmem:[%s40 + $0x3] sm:$0x1]
  %v172 = vld [vmem:[%s40 + $0x4] sm:$0x1]
  %v173 = vld [vmem:[%s40 + $0x5] sm:$0x1]
  %v174 = vld [vmem:[%s111] sm:$0x1]
  %v175 = vld [vmem:[%s111 + $0x1] sm:$0x1]
  %v176 = vld [vmem:[%s111 + $0x2] sm:$0x1]
  %v177 = vld [vmem:[%s111 + $0x3] sm:$0x1]
  %v178 = vld [vmem:[%s111 + $0x4] sm:$0x1]
  %v179 = vld [vmem:[%s111 + $0x5] sm:$0x1]
  %v180 = vld [vmem:[%s111 + $0x6] sm:$0x1]
  %s181 = scalar_lea.vmem %s20, 28
  %v182 = vld [vmem:[%s181 + $0x1] sm:$0x1]
  %v183 = vld [vmem:[%s181 + $0x2] sm:$0x1]
  %v184 = vld [vmem:[%s181 + $0x3] sm:$0x1]
  %v185 = vld [vmem:[%s181 + $0x4] sm:$0x1]
  %v186 = vld [vmem:[%s181 + $0x5] sm:$0x1]
  %v187 = vsub.f32 %v175, %v169
  %v188 = vsub.f32 %v176, %v170
  %v189 = vsub.f32 %v177, %v171
  %v190 = vsub.f32 %v178, %v172
  %v191 = vsub.f32 %v179, %v173
  %v192 = vsub.f32 %v175, %v182
  %v193 = vsub.f32 %v176, %v183
  %v194 = vsub.f32 %v177, %v184
  %v195 = vsub.f32 %v178, %v185
  %v196 = vsub.f32 %v179, %v186
  %v197 = vadd.f32 %v187, %v192
  %v198 = vadd.f32 %v188, %v193
  %v199 = vadd.f32 %v189, %v194
  %v200 = vadd.f32 %v190, %v195
  %v201 = vadd.f32 %v191, %v196
  %v202 = vsub.f32 %v175, %v174
  %v203 = vsub.f32 %v176, %v175
  %v204 = vsub.f32 %v177, %v176
  %v205 = vsub.f32 %v178, %v177
  %v206 = vsub.f32 %v179, %v178
  %v207 = vadd.f32 %v197, %v202
  %v208 = vadd.f32 %v198, %v203
  %v209 = vadd.f32 %v199, %v204
  %v210 = vadd.f32 %v200, %v205
  %v211 = vadd.f32 %v201, %v206
  %v212 = vsub.f32 %v175, %v176
  %v213 = vsub.f32 %v176, %v177
  %v214 = vsub.f32 %v177, %v178
  %v215 = vsub.f32 %v178, %v179
  %v216 = vsub.f32 %v179, %v180
  %v217 = vadd.f32 %v207, %v212
  %v218 = vadd.f32 %v208, %v213
  %v219 = vadd.f32 %v209, %v214
  %v220 = vadd.f32 %v210, %v215
  %v221 = vadd.f32 %v211, %v216
  %v222 = vld [vmem:[%s1] sm:$0x1]
  %v223 = vand.u32 2147483647, %v217
  %v224 = vand.u32 2147483647, %v218
  %v225 = vand.u32 2147483647, %v219
  %v226 = vand.u32 2147483647, %v220
  %v227 = vand.u32 2147483647, %v221
  %v228 = vsel %vm87, %v223, 0.0
  %v229 = vsel %vm87, %v224, 0.0
  %v230 = vadd.f32 %v228, %v229
  %v231 = vsel %vm87, %v225, 0.0
  %v232 = vadd.f32 %v230, %v231
  %v233 = vsel %vm87, %v226, 0.0
  %v234 = vadd.f32 %v232, %v233
  %v235 = vsel %vm87, %v227, 0.0
  %v236 = vadd.f32 %v234, %v235
  %v237 = vadd.f32 %v222, %v236
  %238 = vst [vmem:[%s1] sm:$0x1] %v237
  %v239 = vld [vmem:[%s111 + $0x1] sm:$0x1]
  %v240 = vld [vmem:[%s111 + $0x2] sm:$0x1]
  %v241 = vld [vmem:[%s111 + $0x3] sm:$0x1]
  %v242 = vld [vmem:[%s111 + $0x4] sm:$0x1]
  %v243 = vld [vmem:[%s111 + $0x5] sm:$0x1]
  %v244 = vld [vmem:[%s181] sm:$0x1]
  %v245 = vld [vmem:[%s181 + $0x1] sm:$0x1]
  %v246 = vld [vmem:[%s181 + $0x2] sm:$0x1]
  %v247 = vld [vmem:[%s181 + $0x3] sm:$0x1]
  %v248 = vld [vmem:[%s181 + $0x4] sm:$0x1]
  %v249 = vld [vmem:[%s181 + $0x5] sm:$0x1]
  %v250 = vld [vmem:[%s181 + $0x6] sm:$0x1]
  %s251 = scalar_lea.vmem %s20, 35
  %v252 = vld [vmem:[%s251 + $0x1] sm:$0x1]
  %v253 = vld [vmem:[%s251 + $0x2] sm:$0x1]
  %v254 = vld [vmem:[%s251 + $0x3] sm:$0x1]
  %v255 = vld [vmem:[%s251 + $0x4] sm:$0x1]
  %v256 = vld [vmem:[%s251 + $0x5] sm:$0x1]
  %v257 = vsub.f32 %v245, %v239
  %v258 = vsub.f32 %v246, %v240
  %v259 = vsub.f32 %v247, %v241
  %v260 = vsub.f32 %v248, %v242
  %v261 = vsub.f32 %v249, %v243
  %v262 = vsub.f32 %v245, %v252
  %v263 = vsub.f32 %v246, %v253
  %v264 = vsub.f32 %v247, %v254
  %v265 = vsub.f32 %v248, %v255
  %v266 = vsub.f32 %v249, %v256
  %v267 = vadd.f32 %v257, %v262
  %v268 = vadd.f32 %v258, %v263
  %v269 = vadd.f32 %v259, %v264
  %v270 = vadd.f32 %v260, %v265
  %v271 = vadd.f32 %v261, %v266
  %v272 = vsub.f32 %v245, %v244
  %v273 = vsub.f32 %v246, %v245
  %v274 = vsub.f32 %v247, %v246
  %v275 = vsub.f32 %v248, %v247
  %v276 = vsub.f32 %v249, %v248
  %v277 = vadd.f32 %v267, %v272
  %v278 = vadd.f32 %v268, %v273
  %v279 = vadd.f32 %v269, %v274
  %v280 = vadd.f32 %v270, %v275
  %v281 = vadd.f32 %v271, %v276
  %v282 = vsub.f32 %v245, %v246
  %v283 = vsub.f32 %v246, %v247
  %v284 = vsub.f32 %v247, %v248
  %v285 = vsub.f32 %v248, %v249
  %v286 = vsub.f32 %v249, %v250
  %v287 = vadd.f32 %v277, %v282
  %v288 = vadd.f32 %v278, %v283
  %v289 = vadd.f32 %v279, %v284
  %v290 = vadd.f32 %v280, %v285
  %v291 = vadd.f32 %v281, %v286
  %v292 = vld [vmem:[%s1] sm:$0x1]
  %v293 = vand.u32 2147483647, %v287
  %v294 = vand.u32 2147483647, %v288
  %v295 = vand.u32 2147483647, %v289
  %v296 = vand.u32 2147483647, %v290
  %v297 = vand.u32 2147483647, %v291
  %v298 = vsel %vm87, %v293, 0.0
  %v299 = vsel %vm87, %v294, 0.0
  %v300 = vadd.f32 %v298, %v299
  %v301 = vsel %vm87, %v295, 0.0
  %v302 = vadd.f32 %v300, %v301
  %v303 = vsel %vm87, %v296, 0.0
  %v304 = vadd.f32 %v302, %v303
  %v305 = vsel %vm87, %v297, 0.0
  %v306 = vadd.f32 %v304, %v305
  %v307 = vadd.f32 %v292, %v306
  %308 = vst [vmem:[%s1] sm:$0x1] %v307
  %v309 = vld [vmem:[%s181 + $0x1] sm:$0x1]
  %v310 = vld [vmem:[%s181 + $0x2] sm:$0x1]
  %v311 = vld [vmem:[%s181 + $0x3] sm:$0x1]
  %v312 = vld [vmem:[%s181 + $0x4] sm:$0x1]
  %v313 = vld [vmem:[%s181 + $0x5] sm:$0x1]
  %v314 = vld [vmem:[%s251] sm:$0x1]
  %v315 = vld [vmem:[%s251 + $0x1] sm:$0x1]
  %v316 = vld [vmem:[%s251 + $0x2] sm:$0x1]
  %v317 = vld [vmem:[%s251 + $0x3] sm:$0x1]
  %v318 = vld [vmem:[%s251 + $0x4] sm:$0x1]
  %v319 = vld [vmem:[%s251 + $0x5] sm:$0x1]
  %v320 = vld [vmem:[%s251 + $0x6] sm:$0x1]
  %s321 = scalar_lea.vmem %s20, 42
  %v322 = vld [vmem:[%s321 + $0x1] sm:$0x1]
  %v323 = vld [vmem:[%s321 + $0x2] sm:$0x1]
  %v324 = vld [vmem:[%s321 + $0x3] sm:$0x1]
  %v325 = vld [vmem:[%s321 + $0x4] sm:$0x1]
  %v326 = vld [vmem:[%s321 + $0x5] sm:$0x1]
  %v327 = vsub.f32 %v315, %v309
  %v328 = vsub.f32 %v316, %v310
  %v329 = vsub.f32 %v317, %v311
  %v330 = vsub.f32 %v318, %v312
  %v331 = vsub.f32 %v319, %v313
  %v332 = vsub.f32 %v315, %v322
  %v333 = vsub.f32 %v316, %v323
  %v334 = vsub.f32 %v317, %v324
  %v335 = vsub.f32 %v318, %v325
  %v336 = vsub.f32 %v319, %v326
  %v337 = vadd.f32 %v327, %v332
  %v338 = vadd.f32 %v328, %v333
  %v339 = vadd.f32 %v329, %v334
  %v340 = vadd.f32 %v330, %v335
  %v341 = vadd.f32 %v331, %v336
  %v342 = vsub.f32 %v315, %v314
  %v343 = vsub.f32 %v316, %v315
  %v344 = vsub.f32 %v317, %v316
  %v345 = vsub.f32 %v318, %v317
  %v346 = vsub.f32 %v319, %v318
  %v347 = vadd.f32 %v337, %v342
  %v348 = vadd.f32 %v338, %v343
  %v349 = vadd.f32 %v339, %v344
  %v350 = vadd.f32 %v340, %v345
  %v351 = vadd.f32 %v341, %v346
  %v352 = vsub.f32 %v315, %v316
  %v353 = vsub.f32 %v316, %v317
  %v354 = vsub.f32 %v317, %v318
  %v355 = vsub.f32 %v318, %v319
  %v356 = vsub.f32 %v319, %v320
  %v357 = vadd.f32 %v347, %v352
  %v358 = vadd.f32 %v348, %v353
  %v359 = vadd.f32 %v349, %v354
  %v360 = vadd.f32 %v350, %v355
  %v361 = vadd.f32 %v351, %v356
  %v362 = vld [vmem:[%s1] sm:$0x1]
  %v363 = vand.u32 2147483647, %v357
  %v364 = vand.u32 2147483647, %v358
  %v365 = vand.u32 2147483647, %v359
  %v366 = vand.u32 2147483647, %v360
  %v367 = vand.u32 2147483647, %v361
  %v368 = vsel %vm87, %v363, 0.0
  %v369 = vsel %vm87, %v364, 0.0
  %v370 = vadd.f32 %v368, %v369
  %v371 = vsel %vm87, %v365, 0.0
  %v372 = vadd.f32 %v370, %v371
  %v373 = vsel %vm87, %v366, 0.0
  %v374 = vadd.f32 %v372, %v373
  %v375 = vsel %vm87, %v367, 0.0
  %v376 = vadd.f32 %v374, %v375
  %v377 = vadd.f32 %v362, %v376
  %378 = vst [vmem:[%s1] sm:$0x1] %v377
  // Predicated region
  $region10: #{laplace_l1.1} parent=0 // pred_check
    _
  $region11: #{laplace_l1.1} parent=0 // pred_check_branch
    %380 = sbr.rel (0) target = $region13
  $region12: #{laplace_l1.1} parent=0 // pred_region
    _
  $region13: #{laplace_l1.1} parent=0 // pred_fallthru
    _
  // Predicated region
  $region14: #{laplace_l1.1} parent=0 // pred_check
    _
  $region15: #{laplace_l1.1} parent=0 // pred_check_branch
    %382 = sbr.rel (0) target = $region17
  $region16: #{laplace_l1.1} parent=0 // pred_region
    _
  $region17: #{laplace_l1.1} parent=0 // pred_fallthru
    _

</llo_original>
